<compile_context>
chip_gen: v7x
topology: tpu7x:2x2x1
jax: 0.10.0
libtpu: 0.0.40
codegen_flags: <defaults>
</compile_context>

<pallas_src>
import functools

import jax
import jax.numpy as jnp
from jax.experimental import pallas as pl
from jax.experimental.pallas import tpu as pltpu


def _dense_conv_kernel(x_ref, p_ref, w_ref, b_ref, o_ref, *, cin, cout):
    # x_ref: (cin, H*W)        original input, channel-major, lane-dense
    # p_ref: (9*cin, H*W)      im2col patches for this batch element
    # w_ref: (cout, 9*cin)     conv weights, reshaped
    # b_ref: (cout, 1)         bias
    # o_ref: (cin+cout, H*W)   fused concat output
    # Fused concat: passthrough of the input channels.
    o_ref[:cin, :] = x_ref[...]
    # Single MXU push: (cout, 9*cin) @ (9*cin, H*W) -> (cout, H*W), f32 acc.
    y = jnp.dot(w_ref[...], p_ref[...], preferred_element_type=jnp.float32)
    y = jnp.maximum(y + b_ref[...], 0.0)  # bias + ReLU on full vregs
    o_ref[cin:, :] = y.astype(o_ref.dtype)


def _dense_conv_pallas(x_flat, patches, w2, b2):
    """x_flat: (B, Cin, HW); patches: (B, 9*Cin, HW); w2: (Cout, 9*Cin); b2: (Cout, 1)."""
    B, Cin, HW = x_flat.shape
    K = patches.shape[1]
    Cout = w2.shape[0]
    Ctot = Cin + Cout

    kernel = functools.partial(_dense_conv_kernel, cin=Cin, cout=Cout)

    return pl.pallas_call(
        kernel,
        out_shape=jax.ShapeDtypeStruct((B, Ctot, HW), jnp.float32),
        grid_spec=pltpu.PrefetchScalarGridSpec(
            num_scalar_prefetch=0,
            grid=(B,),
            in_specs=[
                pl.BlockSpec((None, Cin, HW), lambda b: (b, 0, 0)),
                pl.BlockSpec((None, K, HW), lambda b: (b, 0, 0)),
                pl.BlockSpec((Cout, K), lambda b: (0, 0)),
                pl.BlockSpec((Cout, 1), lambda b: (0, 0)),
            ],
            out_specs=pl.BlockSpec((None, Ctot, HW), lambda b: (b, 0, 0)),
        ),
        compiler_params=pltpu.CompilerParams(
            dimension_semantics=("parallel",)),
    )(x_flat, patches, w2, b2)


@jax.jit
def dense_conv_forward(x_nchw, w_oihw, bias):
    """dense_conv.forward: cat([x, relu(conv3x3(x, pad=1) + b)], dim=1).

    x_nchw: (B, Cin, H, W); w_oihw: (Cout, Cin, 3, 3); bias: (Cout,)
    returns: (B, Cin + Cout, H, W)
    """
    B, Cin, H, W = x_nchw.shape
    Cout = w_oihw.shape[0]
    HW = H * W

    # Wrapper im2col (stays channel-major; lane axis = H*W).
    # patches[b, ci*9 + (kh*3 + kw), h*W + w] = x_pad[b, ci, h + kh, w + kw]
    x_pad = jnp.pad(x_nchw, ((0, 0), (0, 0), (1, 1), (1, 1)))
    taps = [x_pad[:, :, kh:kh + H, kw:kw + W]
            for kh in range(3) for kw in range(3)]
    patches = jnp.stack(taps, axis=2).reshape(B, Cin * 9, HW)

    # Weights: (Cout, Cin, 3, 3) -> (Cout, Cin*9) matches the patch index order.
    w2 = w_oihw.reshape(Cout, Cin * 9)
    b2 = bias.reshape(Cout, 1)
    x_flat = x_nchw.reshape(B, Cin, HW)

    out = _dense_conv_pallas(x_flat, patches, w2, b2)
    # Free reshape (no transpose): (B, Cin+Cout, H*W) -> (B, Cin+Cout, H, W).
    return out.reshape(B, Cin + Cout, H, W)


if __name__ == "__main__":
    B, Cin, H, W = 2, 4, 16, 16
    grow_rate = 8  # out_channels of the CoMo conv

    key = jax.random.PRNGKey(0)
    kx, kw, kb = jax.random.split(key, 3)
    x = jax.random.normal(kx, (B, Cin, H, W), dtype=jnp.float32)
    # Shapes from nn.Conv2d(Cin, grow_rate, 3, padding=1, bias=True)
    w = jax.random.normal(kw, (grow_rate, Cin, 3, 3), dtype=jnp.float32) * 0.1
    b = jax.random.normal(kb, (grow_rate,), dtype=jnp.float32) * 0.1

    out = jax.block_until_ready(dense_conv_forward(x, w, b))
    assert out.shape == (B, Cin + grow_rate, H, W), out.shape

    # Reference check against XLA's conv (not part of the kernel hot path).
    ref_y = jax.lax.conv_general_dilated(
        x, w, window_strides=(1, 1), padding=((1, 1), (1, 1)),
        dimension_numbers=("NCHW", "OIHW", "NCHW"))
    ref = jnp.concatenate(
        [x, jnp.maximum(ref_y + b[None, :, None, None], 0.0)], axis=1)
    assert jnp.allclose(out, ref, atol=1e-4, rtol=1e-4)

    print("KERNEL_OK")
</pallas_src>

<mosaic_0001>
module attributes {stable_mosaic.version = 11 : i64} {
  func.func @_dense_conv_kernel(%arg0: i32, %arg1: memref<1x4x256xf32, #tpu.memory_space<vmem>>, %arg2: memref<1x36x256xf32, #tpu.memory_space<vmem>>, %arg3: memref<8x36xf32, #tpu.memory_space<vmem>>, %arg4: memref<8x1xf32, #tpu.memory_space<vmem>>, %arg5: memref<1x12x256xf32, #tpu.memory_space<vmem>>) attributes {dimension_semantics = [#tpu.dimension_semantics<parallel>], iteration_bounds = array<i64: 2>, scalar_prefetch = 0 : i64, scratch_operands = 0 : i64, tpu.core_type = #tpu.core_type<tc>, window_params = [{transform_indices = @transform_0, window_bounds = array<i64: 1, 4, 256>}, {transform_indices = @transform_1, window_bounds = array<i64: 1, 36, 256>}, {pipeline_mode = #tpu.pipeline_mode<synchronous>, transform_indices = @transform_2, window_bounds = array<i64: 8, 36>}, {pipeline_mode = #tpu.pipeline_mode<synchronous>, transform_indices = @transform_3, window_bounds = array<i64: 8, 1>}, {transform_indices = @transform_4, window_bounds = array<i64: 1, 12, 256>}]} {
    %c0 = arith.constant 0 : index
    %c0_0 = arith.constant 0 : index
    %c0_1 = arith.constant 0 : index
    %0 = vector.load %arg1[%c0, %c0_0, %c0_1] : memref<1x4x256xf32, #tpu.memory_space<vmem>>, vector<1x4x256xf32>
    %1 = vector.shape_cast %0 : vector<1x4x256xf32> to vector<4x256xf32>
    %c0_2 = arith.constant 0 : index
    %c0_3 = arith.constant 0 : index
    %c0_4 = arith.constant 0 : index
    %2 = vector.load %arg5[%c0_2, %c0_3, %c0_4] : memref<1x12x256xf32, #tpu.memory_space<vmem>>, vector<1x4x256xf32>
    %3 = vector.shape_cast %2 : vector<1x4x256xf32> to vector<4x256xf32>
    %4 = vector.shape_cast %1 : vector<4x256xf32> to vector<1x4x256xf32>
    tpu.vector_store %arg5[%c0_2, %c0_3, %c0_4], %4 {strides = array<i32>} : memref<1x12x256xf32, #tpu.memory_space<vmem>>, vector<1x4x256xf32>,
    %c0_5 = arith.constant 0 : index
    %c0_6 = arith.constant 0 : index
    %5 = vector.load %arg3[%c0_5, %c0_6] : memref<8x36xf32, #tpu.memory_space<vmem>>, vector<8x36xf32>
    %c0_7 = arith.constant 0 : index
    %c0_8 = arith.constant 0 : index
    %c0_9 = arith.constant 0 : index
    %6 = vector.load %arg2[%c0_7, %c0_8, %c0_9] : memref<1x36x256xf32, #tpu.memory_space<vmem>>, vector<1x36x256xf32>
    %7 = vector.shape_cast %6 : vector<1x36x256xf32> to vector<36x256xf32>
    %cst = arith.constant dense<0.000000e+00> : vector<8x256xf32>
    %8 = tpu.matmul %5, %7, %cst {dimension_numbers = #tpu.dot_dimension_numbers<[1], [0], [0], [1], [0, 0, 1, 1], [], []>} : vector<8x36xf32>, vector<36x256xf32>, vector<8x256xf32> -> vector<8x256xf32>
    %c0_10 = arith.constant 0 : index
    %c0_11 = arith.constant 0 : index
    %9 = vector.load %arg4[%c0_10, %c0_11] : memref<8x1xf32, #tpu.memory_space<vmem>>, vector<8x1xf32>
    %10 = vector.broadcast %9 : vector<8x1xf32> to vector<8x256xf32>
    %11 = arith.addf %8, %10 : vector<8x256xf32>
    %cst_12 = arith.constant 0.000000e+00 : f32
    %12 = vector.broadcast %cst_12 : f32 to vector<8x256xf32>
    %13 = arith.maximumf %11, %12 : vector<8x256xf32>
    %c0_13 = arith.constant 0 : index
    %c4 = arith.constant 4 : index
    %c0_14 = arith.constant 0 : index
    %14 = vector.load %arg5[%c0_13, %c4, %c0_14] : memref<1x12x256xf32, #tpu.memory_space<vmem>>, vector<1x8x256xf32>
    %15 = vector.shape_cast %14 : vector<1x8x256xf32> to vector<8x256xf32>
    %16 = vector.shape_cast %13 : vector<8x256xf32> to vector<1x8x256xf32>
    tpu.vector_store %arg5[%c0_13, %c4, %c0_14], %16 {strides = array<i32>} : memref<1x12x256xf32, #tpu.memory_space<vmem>>, vector<1x8x256xf32>,
    return
  }
  func.func @transform_0(%arg0: i32) -> (i32, i32, i32) {
    %c0_i32 = arith.constant 0 : i32
    %c0_i32_0 = arith.constant 0 : i32
    %c0_i32_1 = arith.constant 0 : i32
    return %arg0, %c0_i32, %c0_i32_0 : i32, i32, i32
  }
  func.func @transform_1(%arg0: i32) -> (i32, i32, i32) {
    %c0_i32 = arith.constant 0 : i32
    %c0_i32_0 = arith.constant 0 : i32
    %c0_i32_1 = arith.constant 0 : i32
    return %arg0, %c0_i32, %c0_i32_0 : i32, i32, i32
  }
  func.func @transform_2(%arg0: i32) -> (i32, i32) {
    %c0_i32 = arith.constant 0 : i32
    %c0_i32_0 = arith.constant 0 : i32
    %c0_i32_1 = arith.constant 0 : i32
    return %c0_i32, %c0_i32_0 : i32, i32
  }
  func.func @transform_3(%arg0: i32) -> (i32, i32) {
    %c0_i32 = arith.constant 0 : i32
    %c0_i32_0 = arith.constant 0 : i32
    %c0_i32_1 = arith.constant 0 : i32
    return %c0_i32, %c0_i32_0 : i32, i32
  }
  func.func @transform_4(%arg0: i32) -> (i32, i32, i32) {
    %c0_i32 = arith.constant 0 : i32
    %c0_i32_0 = arith.constant 0 : i32
    %c0_i32_1 = arith.constant 0 : i32
    return %arg0, %c0_i32, %c0_i32_0 : i32, i32, i32
  }
}

</mosaic_0001>

<llo_original>
// kernel: dense_conv_forward.1
$region0: #{dense_conv_forward.1}
  #allocation0 [shape = 'u32[]', space=smem, size = 0x4, offset = 0x4, fixed_abs, tag = 'smem constant byte address 0x4 - core index']
  #allocation1 [shape = 'u32[144,128]{1,0:T(1,128)}', space=vmem, size = 0x12000, scoped, tag = 'internal scratch']
  %s0 = inlined_call_operand.vmem [shape: f32[2,4,256], index: 0, kind: input, shape index: {}]
  %s1 = inlined_call_operand.vmem [shape: f32[2,36,256], index: 1, kind: input, shape index: {}]
  %s2 = inlined_call_operand.vmem [shape: f32[8,36], index: 2, kind: input, shape index: {}]
  %s3 = inlined_call_operand.vmem [shape: f32[8,1], index: 3, kind: input, shape index: {}]
  %s4 = inlined_call_operand.vmem [shape: f32[2,12,256], index: 4, kind: output, shape index: {}]
  %s5 = sld [smem:[#allocation0]]
  $region49: #{dense_conv_forward.1} parent=0
    _
  %s7 = ssub.s32 1, %s5
  %s8 = scalar_select 0, %s7, %s5
  loop: start=0, step=1, limit=4
  $region2: #{dense_conv_forward.1} parent=0 // loop_pre_header
    _
  $region3: #{dense_conv_forward.1} parent=0 // loop_header
    %s10 = sphi 0, %s14
    %p11 = scmp.ge.s32.totalorder %s10, 4
    %s20 = sphi 0, %s22
    %s23 = sphi 0, %s20
    %s24 = sphi 0, %s23
    %s40 = sphi 0, %s24
    %s46 = sphi 0, %s48
    %s49 = sphi 0, %s46
    %s50 = sphi 0, %s49
    %s66 = sphi 0, %s50
    %s70 = sphi 0, %s70
    %s72 = sphi 0, %s70
    %s73 = sphi 0, %s72
    %s87 = sphi 0, %s73
    %s91 = sphi 0, %s91
    %s93 = sphi 0, %s91
    %s94 = sphi 0, %s93
    %s108 = sphi 0, %s94
    %s114 = sphi 0, %s116
    %s117 = sphi 0, %s114
    %s118 = sphi 0, %s117
    %s134 = sphi 0, %s118
  $region4: #{dense_conv_forward.1} parent=0 // loop_header_branch
    %13 = sbr.rel (%p11) target = $region8
  $region5: #{dense_conv_forward.1} parent=0 // loop_body
    %s15 = ssub.s32 %s10, 1
    %s16 = ssub.s32 %s10, 2
    %s17 = sadd.s32 %s10, 1
    %s18 = ssub.s32 %s10, %s17
    %p19 = scmp.eq.s32.totalorder %s18, 0
    %s21 = sadd.s32 %s20, 1
    %s22 = scalar_select %p19, %s20, %s21
    %p25 = pneg %p19
    %p26 = scmp.eq.s32.totalorder %s10, 1
    %p27 = por %p25, %p26
    %p28 = scmp.ne.s32.totalorder %s20, %s23
    %p29 = scmp.eq.s32.totalorder %s10, 0
    %p30 = por %p28, %p29
    %p31 = scmp.ne.s32.totalorder %s20, %s23
    %p32 = scmp.eq.s32.totalorder %s15, 1
    %p33 = por %p31, %p32
    %p34 = scmp.ne.s32.totalorder %s23, %s24
    %p35 = scmp.eq.s32.totalorder %s15, 0
    %p36 = por %p34, %p35
    %p37 = scmp.ne.s32.totalorder %s23, %s24
    %p38 = scmp.eq.s32.totalorder %s16, 1
    %p39 = por %p37, %p38
    %p41 = scmp.ne.s32.totalorder %s24, %s40
    %p42 = scmp.eq.s32.totalorder %s16, 0
    %p43 = por %p41, %p42
    %s44 = ssub.s32 %s10, %s17
    %p45 = scmp.eq.s32.totalorder %s44, 0
    %s47 = sadd.s32 %s46, 1
    %s48 = scalar_select %p45, %s46, %s47
    %p51 = pneg %p45
    %p52 = scmp.eq.s32.totalorder %s10, 1
    %p53 = por %p51, %p52
    %p54 = scmp.ne.s32.totalorder %s46, %s49
    %p55 = scmp.eq.s32.totalorder %s10, 0
    %p56 = por %p54, %p55
    %p57 = scmp.ne.s32.totalorder %s46, %s49
    %p58 = scmp.eq.s32.totalorder %s15, 1
    %p59 = por %p57, %p58
    %p60 = scmp.ne.s32.totalorder %s49, %s50
    %p61 = scmp.eq.s32.totalorder %s15, 0
    %p62 = por %p60, %p61
    %p63 = scmp.ne.s32.totalorder %s49, %s50
    %p64 = scmp.eq.s32.totalorder %s16, 1
    %p65 = por %p63, %p64
    %p67 = scmp.ne.s32.totalorder %s50, %s66
    %p68 = scmp.eq.s32.totalorder %s16, 0
    %p69 = por %p67, %p68
    %s71 = sadd.s32 %s70, 1
    %p74 = scmp.eq.s32.totalorder %s10, 1
    %p75 = scmp.ne.s32.totalorder %s70, %s72
    %p76 = scmp.eq.s32.totalorder %s10, 0
    %p77 = por %p75, %p76
    %p78 = scmp.ne.s32.totalorder %s70, %s72
    %p79 = scmp.eq.s32.totalorder %s15, 1
    %p80 = por %p78, %p79
    %p81 = scmp.ne.s32.totalorder %s72, %s73
    %p82 = scmp.eq.s32.totalorder %s15, 0
    %p83 = por %p81, %p82
    %p84 = scmp.ne.s32.totalorder %s72, %s73
    %p85 = scmp.eq.s32.totalorder %s16, 1
    %p86 = por %p84, %p85
    %p88 = scmp.ne.s32.totalorder %s73, %s87
    %p89 = scmp.eq.s32.totalorder %s16, 0
    %p90 = por %p88, %p89
    %s92 = sadd.s32 %s91, 1
    %p95 = scmp.eq.s32.totalorder %s10, 1
    %p96 = scmp.ne.s32.totalorder %s91, %s93
    %p97 = scmp.eq.s32.totalorder %s10, 0
    %p98 = por %p96, %p97
    %p99 = scmp.ne.s32.totalorder %s91, %s93
    %p100 = scmp.eq.s32.totalorder %s15, 1
    %p101 = por %p99, %p100
    %p102 = scmp.ne.s32.totalorder %s93, %s94
    %p103 = scmp.eq.s32.totalorder %s15, 0
    %p104 = por %p102, %p103
    %p105 = scmp.ne.s32.totalorder %s93, %s94
    %p106 = scmp.eq.s32.totalorder %s16, 1
    %p107 = por %p105, %p106
    %p109 = scmp.ne.s32.totalorder %s94, %s108
    %p110 = scmp.eq.s32.totalorder %s16, 0
    %p111 = por %p109, %p110
    %s112 = ssub.s32 %s10, %s17
    %p113 = scmp.eq.s32.totalorder %s112, 0
    %s115 = sadd.s32 %s114, 1
    %s116 = scalar_select %p113, %s114, %s115
    %p119 = pneg %p113
    %p120 = scmp.eq.s32.totalorder %s10, 1
    %p121 = por %p119, %p120
    %p122 = scmp.ne.s32.totalorder %s114, %s117
    %p123 = scmp.eq.s32.totalorder %s10, 0
    %p124 = por %p122, %p123
    %p125 = scmp.ne.s32.totalorder %s114, %s117
    %p126 = scmp.eq.s32.totalorder %s15, 1
    %p127 = por %p125, %p126
    %p128 = scmp.ne.s32.totalorder %s117, %s118
    %p129 = scmp.eq.s32.totalorder %s15, 0
    %p130 = por %p128, %p129
    %p131 = scmp.ne.s32.totalorder %s117, %s118
    %p132 = scmp.eq.s32.totalorder %s16, 1
    %p133 = por %p131, %p132
    %p135 = scmp.ne.s32.totalorder %s118, %s134
    %p136 = scmp.eq.s32.totalorder %s16, 0
    %p137 = por %p135, %p136
    %p138 = scmp.le.s32.totalorder 1, %s10
    %p139 = scmp.lt.s32.totalorder %s10, 3
    %p140 = pnand %p138, %p139
    %p141 = pneg %p140
    // Predicated region
    $region9: #{dense_conv_forward.1} parent=5 // pred_check
      _
    $region10: #{dense_conv_forward.1} parent=5 // pred_check_branch
      %143 = sbr.rel (%p140) target = $region12
    $region11: #{dense_conv_forward.1} parent=5 // pred_region
      %s144 = ssub.s32 %s10, 1
      // Predicated region
      $region13: #{dense_conv_forward.1} parent=11 // pred_check
        %p145 = pneg %p83
      $region14: #{dense_conv_forward.1} parent=11 // pred_check_branch
        %147 = sbr.rel (%p145) target = $region16
      $region15: #{dense_conv_forward.1} parent=11 // pred_region
        _
      $region16: #{dense_conv_forward.1} parent=11 // pred_fallthru
        _
      // Predicated region
      $region17: #{dense_conv_forward.1} parent=11 // pred_check
        %p148 = pneg %p104
      $region18: #{dense_conv_forward.1} parent=11 // pred_check_branch
        %150 = sbr.rel (%p148) target = $region20
      $region19: #{dense_conv_forward.1} parent=11 // pred_region
        _
      $region20: #{dense_conv_forward.1} parent=11 // pred_fallthru
        _
    $region12: #{dense_conv_forward.1} parent=5 // pred_fallthru
      _
    %p151 = scmp.lt.s32.totalorder %s10, 2
    // Predicated region
    $region21: #{dense_conv_forward.1} parent=5 // pred_check
      %p152 = pneg %p151
    $region22: #{dense_conv_forward.1} parent=5 // pred_check_branch
      %154 = sbr.rel (%p152) target = $region24
    $region23: #{dense_conv_forward.1} parent=5 // pred_region
      // Predicated region
      $region25: #{dense_conv_forward.1} parent=23 // pred_check
        %p155 = pneg %p30
      $region26: #{dense_conv_forward.1} parent=23 // pred_check_branch
        %157 = sbr.rel (%p155) target = $region28
      $region27: #{dense_conv_forward.1} parent=23 // pred_region
        %p158 = scmp.lt.s32.totalorder %s10, 1
        %s159 = scalar_select %p158, %s10, 1
        %s160 = smul.addr %s159, 2
        %s161 = smul.addr %s160, 4
        %s162 = scalar_lea.vmem %s0, %s161
      $region28: #{dense_conv_forward.1} parent=23 // pred_fallthru
        _
      // Predicated region
      $region29: #{dense_conv_forward.1} parent=23 // pred_check
        %p163 = pneg %p56
      $region30: #{dense_conv_forward.1} parent=23 // pred_check_branch
        %165 = sbr.rel (%p163) target = $region32
      $region31: #{dense_conv_forward.1} parent=23 // pred_region
        %p166 = scmp.lt.s32.totalorder %s10, 1
        %s167 = scalar_select %p166, %s10, 1
        %s168 = smul.addr %s167, 10
        %s169 = smul.addr %s168, 8
        %s170 = scalar_lea.vmem %s1, %s169
      $region32: #{dense_conv_forward.1} parent=23 // pred_fallthru
        _
    $region24: #{dense_conv_forward.1} parent=5 // pred_fallthru
      _
    %p171 = scmp.le.s32.totalorder 1, %s10
    %p172 = scmp.lt.s32.totalorder %s10, 3
    %p173 = pnand %p171, %p172
    %p174 = pneg %p173
    // Predicated region
    $region33: #{dense_conv_forward.1} parent=5 // pred_check
      _
    $region34: #{dense_conv_forward.1} parent=5 // pred_check_branch
      %176 = sbr.rel (%p173) target = $region36
    $region35: #{dense_conv_forward.1} parent=5 // pred_region
      %s177 = ssub.s32 %s10, 1
      %p178 = scmp.lt.s32.totalorder %s15, 1
      %s179 = scalar_select %p178, %s15, 1
      %s180 = smul.addr %s179, 2
      %s181 = smul.addr %s180, 4
      %s182 = scalar_lea.vmem %s0, %s181
      %p183 = pneg %p36
      %p184 = pneg %p33
      %p185 = scmp.lt.s32.totalorder %s15, 1
      %s186 = scalar_select %p185, %s15, 1
      %s187 = smul.addr %s186, 10
      %s188 = smul.addr %s187, 8
      %s189 = scalar_lea.vmem %s1, %s188
      %p190 = pneg %p62
      %p191 = pneg %p59
      %p192 = pneg %p83
      %p193 = pneg %p80
      %p194 = pneg %p104
      %p195 = pneg %p101
      %p196 = pneg %p130
      %p197 = pneg %p127
      %p198 = scmp.lt.s32.totalorder %s15, 1
      %s199 = scalar_select %p198, %s15, 1
      %s200 = smul.addr %s199, 4
      %s201 = smul.addr %s200, 8
      %s202 = scalar_lea.vmem %s4, %s201
      %p203 = scmp.lt.s32.totalorder %s15, 1
      %s204 = scalar_select %p203, %s15, 1
      %s205 = smul.addr %s204, 2
      %s206 = smul.addr %s205, 4
      %s207 = scalar_lea.vmem %s0, %s206
      %p208 = scmp.lt.s32.totalorder %s15, 1
      %s209 = scalar_select %p208, %s15, 1
      %s210 = smul.addr %s209, 10
      %s211 = smul.addr %s210, 8
      %s212 = scalar_lea.vmem %s1, %s211
      %p213 = scmp.lt.s32.totalorder %s15, 1
      %s214 = scalar_select %p213, %s15, 1
      %s215 = smul.addr %s214, 4
      %s216 = smul.addr %s215, 8
      %s217 = scalar_lea.vmem %s4, %s216
      %v218 = vld [vmem:[%s207] sm:$0xff]
      %v220 = vcombine.high %v218, %v218
      %222 = vst [vmem:[%s217] sm:$0xf] %v218
      %223 = vst [vmem:[%s217 + $0x8] sm:$0xf] %v220
      %v224 = vld [vmem:[%s2] sm:$0xff]
      %v225 = vld [vmem:[%s212] sm:$0xff]
      %v226 = vld [vmem:[%s212 + $0x8] sm:$0xff]
      %v227 = vld [vmem:[%s212 + $0x10] sm:$0xff]
      %v228 = vld [vmem:[%s212 + $0x18] sm:$0xff]
      %v229 = vld [vmem:[%s212 + $0x20] sm:$0xff]
      %v230 = vld [vmem:[%s212 + $0x28] sm:$0xff]
      %v231 = vld [vmem:[%s212 + $0x30] sm:$0xff]
      %v232 = vld [vmem:[%s212 + $0x38] sm:$0xff]
      %v233 = vld [vmem:[%s212 + $0x40] sm:$0xf]
      %v234 = vld [vmem:[%s212 + $0x48] sm:$0xf]
      %v235 = vld [vmem:[%s3] sm:$0xff]
      %237 = vset.pattern.permute.xlu0 0
      %238 = vperm.xlu0 %237, %v235
      %v239 = vpop.permute.xlu0 %238
      %vm241 = vcmask 293888
      %v243 = vsel %vm241, %v224, 0
      %vm245 = vcmask 1043456
      %v247 = vsel %vm245, %v233, 0
      %v250 = vsel %vm245, %v234, 0
      %252 = vmatprep.subr.mxu0 %v226
      %253 = vmatpush1.msra.mxu0 %v225
      %254 = vmatprep.subr.mxu0 %v228
      %255 = vmatpush1.msra.mxu0 %v227
      %256 = vmatprep.subr.mxu0 %v230
      %257 = vmatpush1.msra.mxu0 %v229
      %258 = vmatprep.subr.mxu0 %v232
      %259 = vmatpush1.msra.mxu0 %v231
      %260 = vmatprep.subr.mxu0 %v250
      %261 = vmatpush1.msra.mxu0 %v247
      %262 = vmatprep.subr.mxu0 0.0
      %263 = vmatpush1.msra.mxu0 0.0
      %264 = vmatprep.subr.mxu0 0.0
      %265 = vmatpush1.msra.mxu0 0.0
      %266 = vmatprep.subr.mxu0 0.0
      %267 = vmatpush1.msra.mxu0 0.0
      %268 = vmatprep.subr.mxu0 0.0
      %269 = vmatpush1.msra.mxu0 0.0
      %270 = vmatprep.subr.mxu0 0.0
      %271 = vmatpush1.msra.mxu0 0.0
      %272 = vmatprep.subr.mxu0 0.0
      %273 = vmatpush1.msra.mxu0 0.0
      %274 = vmatprep.subr.mxu0 0.0
      %275 = vmatpush1.msra.mxu0 0.0
      %276 = vmatprep.subr.mxu0 0.0
      %277 = vmatpush1.msra.mxu0 0.0
      %278 = vmatprep.subr.mxu0 0.0
      %279 = vmatpush1.msra.mxu0 0.0
      %280 = vmatprep.subr.mxu0 0.0
      %281 = vmatpush1.msra.mxu0 0.0
      %282 = vmatprep.subr.mxu0 0.0
      %283 = vmatpush1.msra.mxu0 0.0
      %284 = vmatprep.subr.mxu0 0.0
      %285 = vmatpush1.msra.mxu0 0.0
      %286 = vmatprep.subr.mxu0 0.0
      %287 = vmatpush1.msra.mxu0 0.0
      %288 = vmatprep.subr.mxu0 0.0
      %289 = vmatpush1.msra.mxu0 0.0
      %290 = vmatprep.subr.mxu0 0.0
      %291 = vmatpush1.msra.mxu0 0.0
      %292 = vmatprep.subr.mxu0 0.0
      %293 = vmatpush1.msra.mxu0 0.0
      %294 = vmatprep.subr.mxu0 0.0
      %295 = vmatpush1.msra.mxu0 0.0
      %296 = vmatprep.subr.mxu0 0.0
      %297 = vmatpush1.msra.mxu0 0.0
      %298 = vmatprep.subr.mxu0 0.0
      %299 = vmatpush1.msra.mxu0 0.0
      %300 = vmatprep.subr.mxu0 0.0
      %301 = vmatpush1.msra.mxu0 0.0
      %302 = vmatprep.subr.mxu0 0.0
      %303 = vmatpush1.msra.mxu0 0.0
      %304 = vmatprep.subr.mxu0 0.0
      %305 = vmatpush1.msra.mxu0 0.0
      %306 = vmatprep.subr.mxu0 0.0
      %307 = vmatpush1.msra.mxu0 0.0
      %308 = vmatprep.subr.mxu0 0.0
      %309 = vmatpush1.msra.mxu0 0.0
      %310 = vmatprep.subr.mxu0 0.0
      %311 = vmatpush1.msra.mxu0 0.0
      %312 = vmatprep.subr.mxu0 0.0
      %313 = vmatpush1.msra.mxu0 0.0
      %314 = vmatprep.subr.mxu0 0.0
      %315 = vmatpush1.msra.mxu0 0.0
      %316 = vmatprep.mubr.f32.mxu0 0.0
      %317 = vmatmul.mubr.f32.gmra.mrb[0].mxu0 %v243
      %v318 = vpop.f32.mrb[0].mxu0
      %v319 = vadd.f32 %v239, %v318
      %v320 = vpop.f32.mrb[0].mxu0
      %v321 = vadd.f32 %v239, %v320
      %322 = vdwg.mxu0
      %v323 = vmax.f32 %v319, 0.0
      %v324 = vmax.f32 %v321, 0.0
      %v327 = vrot.slane %v323, 4
      %v328 = vrot.slane %v324, 4
      %331 = vst [vmem:[%s217] sm:$0xf0] %v327
      %332 = vst [vmem:[%s217 + $0x8] sm:$0xf0] %v328
      %333 = vst [vmem:[%s217 + $0x10] sm:$0xf] %v327
      %334 = vst [vmem:[%s217 + $0x18] sm:$0xf] %v328
      %p335 = scmp.lt.s32.totalorder %s15, 1
      %s336 = scalar_select %p335, %s15, 1
      %s337 = smul.addr %s336, 4
      %s338 = smul.addr %s337, 8
      %s339 = scalar_lea.vmem %s4, %s338
      // Predicated region
      $region37: #{dense_conv_forward.1} parent=35 // pred_check
        %p340 = pneg %p127
      $region38: #{dense_conv_forward.1} parent=35 // pred_check_branch
        %342 = sbr.rel (%p340) target = $region40
      $region39: #{dense_conv_forward.1} parent=35 // pred_region
        _
      $region40: #{dense_conv_forward.1} parent=35 // pred_fallthru
        _
    $region36: #{dense_conv_forward.1} parent=5 // pred_fallthru
      _
    %p343 = scmp.le.s32.totalorder 2, %s10
    // Predicated region
    $region41: #{dense_conv_forward.1} parent=5 // pred_check
      %p344 = pneg %p343
    $region42: #{dense_conv_forward.1} parent=5 // pred_check_branch
      %346 = sbr.rel (%p344) target = $region44
    $region43: #{dense_conv_forward.1} parent=5 // pred_region
      %s347 = ssub.s32 %s10, 2
      // Predicated region
      $region45: #{dense_conv_forward.1} parent=43 // pred_check
        %p348 = pneg %p133
      $region46: #{dense_conv_forward.1} parent=43 // pred_check_branch
        %350 = sbr.rel (%p348) target = $region48
      $region47: #{dense_conv_forward.1} parent=43 // pred_region
        %p351 = scmp.lt.s32.totalorder %s16, 1
        %s352 = scalar_select %p351, %s16, 1
        %s353 = smul.addr %s352, 4
        %s354 = smul.addr %s353, 8
        %s355 = scalar_lea.vmem %s4, %s354
      $region48: #{dense_conv_forward.1} parent=43 // pred_fallthru
        _
    $region44: #{dense_conv_forward.1} parent=5 // pred_fallthru
      _
  $region6: #{dense_conv_forward.1} parent=0 // loop_footer
    %s14 = sadd.s32 1, %s10
  $region7: #{dense_conv_forward.1} parent=0 // loop_footer_branch
    %9 = sbr.rel target = $region3
  $region8: #{dense_conv_forward.1} parent=0 // loop_exit
    _

</llo_original>
